<compile_context>
chip_gen: v7x
topology: tpu7x:2x2x1
jax: 0.10.0
libtpu: 0.0.40
codegen_flags: <defaults>
</compile_context>

<pallas_src>
import functools

import jax
import jax.numpy as jnp
from jax.experimental import pallas as pl
from jax.experimental.pallas import tpu as pltpu

BN_EPS = 1e-5  # PyTorch BatchNorm1d default eps


def _round_up(x, m):
    return (x + m - 1) // m * m


def _device_kind():
    try:
        return jax.devices()[0].device_kind.lower()
    except Exception:  # pragma: no cover - defensive only
        return ""


def _emb_kernel(pooled_ref, w1_ref, b1_ref, emb_ref, emb_bf16_ref):
    """emb = pooled @ W1 + b1.  Grid = (batch tiles,)."""
    emb = jnp.dot(pooled_ref[...], w1_ref[...],
                  preferred_element_type=jnp.float32) + b1_ref[...]
    emb_ref[...] = emb                          # pre-BN embedding output (fp32)
    emb_bf16_ref[...] = emb.astype(jnp.bfloat16)


def _logits_kernel(emb_ref, w2_ref, b2_ref, logits_ref):
    """logits = emb @ W2' + b2' (BN folded).  Grid = (batch tiles, class tiles)."""
    logits_ref[...] = (
        jnp.dot(emb_ref[...], w2_ref[...],
                preferred_element_type=jnp.float32) + b2_ref[...])


def arc_efficientnet_forward(features_nchw, params, *, block_b=None, block_n=None):
    """features_nchw: (B, C, H, W) output of the EfficientNet backbone."""
    B, C, H, W = features_nchw.shape
    A = params["fc_w"].shape[1]
    N = params["fc2_w"].shape[1]
    kind = _device_kind()

    # ---------------- wrapper-side prep (tiny tensors / trace-time) ----------------
    # AdaptiveAvgPool2d(1) + view(B, -1): fp32 spatial mean of the full map done
    # once here (result is only (B, C)), then cast the tiny pooled tensor to
    # bf16 for the MXU.  Dropout(0.5) is identity in eval mode.
    pooled = jnp.mean(features_nchw.astype(jnp.float32), axis=(2, 3))
    pooled = pooled.astype(jnp.bfloat16)                           # (B, C)

    gamma = params["bn2_gamma"].astype(jnp.float32)
    beta = params["bn2_beta"].astype(jnp.float32)
    mean = params["bn2_mean"].astype(jnp.float32)
    var = params["bn2_var"].astype(jnp.float32)
    w2 = params["fc2_w"].astype(jnp.float32)
    b2 = params["fc2_b"].astype(jnp.float32)

    # Fold eval-mode BatchNorm1d into fc2:  h = emb*s + t
    #   W2' = diag(s) @ W2,  b2' = b2 + t @ W2
    scale = gamma * jax.lax.rsqrt(var + BN_EPS)          # (1, A)
    shift = beta - mean * scale                          # (1, A)
    w2_folded = scale.reshape(A, 1) * w2                 # (A, N)
    b2_folded = b2 + shift @ w2                          # (1, N)

    w1 = params["fc_w"].astype(jnp.bfloat16)             # (C, A)
    b1 = params["fc_b"].astype(jnp.float32)              # (1, A)
    w2_bf16 = w2_folded.astype(jnp.bfloat16)             # (A, N)

    # ---------------- tile sizes & (tiny) padding ----------------
    if block_b is None:
        cap_b = 128 if "v5" in kind else 256    # v5e MXU rows already full at 128
        block_b = min(_round_up(B, 8), cap_b)
    block_b = _round_up(block_b, 8)
    if block_n is None:
        cap_n = 2048 if "v7" in kind else 4096  # bigger class tiles on 128 MiB VMEM chips
        block_n = min(_round_up(N, 128), cap_n)
    block_n = _round_up(block_n, 128)

    b_pad = _round_up(B, block_b)
    n_pad = _round_up(N, block_n)

    if b_pad != B:
        pooled = jnp.pad(pooled, ((0, b_pad - B), (0, 0)))          # tiny (B, C) pad only
    if n_pad != N:
        w2_bf16 = jnp.pad(w2_bf16, ((0, 0), (0, n_pad - N)))
        b2_folded = jnp.pad(b2_folded, ((0, 0), (0, n_pad - N)))

    nb = b_pad // block_b
    nn = n_pad // block_n
    vmem_limit = (48 if "v7" in kind else 96) * 1024 * 1024

    # ---------------- kernel 1: embedding GEMM ----------------
    emb_cost = pl.CostEstimate(
        flops=2 * b_pad * C * A,
        transcendentals=0,
        bytes_accessed=int(pooled.size * 2 + w1.size * 2 + b1.size * 4
                           + b_pad * A * 6),
    )
    emb, emb_bf16 = pl.pallas_call(
        _emb_kernel,
        out_shape=(
            jax.ShapeDtypeStruct((b_pad, A), jnp.float32),    # embedding (pre-BN)
            jax.ShapeDtypeStruct((b_pad, A), jnp.bfloat16),   # bf16 copy for kernel 2
        ),
        grid_spec=pltpu.PrefetchScalarGridSpec(
            num_scalar_prefetch=0,
            grid=(nb,),
            in_specs=[
                pl.BlockSpec((block_b, C), lambda i: (i, 0)),   # pooled
                pl.BlockSpec((C, A), lambda i: (0, 0)),         # fc_w (resident)
                pl.BlockSpec((1, A), lambda i: (0, 0)),         # fc_b (resident)
            ],
            out_specs=(
                pl.BlockSpec((block_b, A), lambda i: (i, 0)),
                pl.BlockSpec((block_b, A), lambda i: (i, 0)),
            ),
        ),
        compiler_params=pltpu.CompilerParams(
            dimension_semantics=("parallel",),
            vmem_limit_bytes=vmem_limit,
        ),
        cost_estimate=emb_cost,
    )(pooled, w1, b1)

    # ---------------- kernel 2: classifier GEMM (BN folded) ----------------
    logits_cost = pl.CostEstimate(
        flops=2 * b_pad * A * n_pad,
        transcendentals=0,
        bytes_accessed=int(b_pad * A * 2 + w2_bf16.size * 2
                           + b2_folded.size * 4 + b_pad * n_pad * 4),
    )
    logits = pl.pallas_call(
        _logits_kernel,
        out_shape=jax.ShapeDtypeStruct((b_pad, n_pad), jnp.float32),
        grid_spec=pltpu.PrefetchScalarGridSpec(
            num_scalar_prefetch=0,
            grid=(nb, nn),
            in_specs=[
                pl.BlockSpec((block_b, A), lambda i, j: (i, 0)),     # emb (bf16)
                pl.BlockSpec((A, block_n), lambda i, j: (0, j)),     # folded fc2_w
                pl.BlockSpec((1, block_n), lambda i, j: (0, j)),     # folded fc2_b
            ],
            out_specs=pl.BlockSpec((block_b, block_n), lambda i, j: (i, j)),
        ),
        compiler_params=pltpu.CompilerParams(
            # No carried state: both axes parallel (dual-TC class sharding on v7x).
            dimension_semantics=("parallel", "parallel"),
            vmem_limit_bytes=vmem_limit,
        ),
        cost_estimate=logits_cost,
    )(emb_bf16, w2_bf16, b2_folded)

    return logits[:B, :N], emb[:B]


def make_params(key, feature, arc_feature, num_classes):
    ks = jax.random.split(key, 8)
    return dict(
        # nn.Linear(feature, ArcFeature): stored transposed as (in, out)
        fc_w=jax.random.normal(ks[0], (feature, arc_feature), jnp.float32) * 0.1,
        fc_b=jax.random.normal(ks[1], (1, arc_feature), jnp.float32) * 0.1,
        # nn.BatchNorm1d(ArcFeature) running stats / affine params
        bn2_gamma=1.0 + 0.1 * jax.random.normal(ks[2], (1, arc_feature), jnp.float32),
        bn2_beta=0.1 * jax.random.normal(ks[3], (1, arc_feature), jnp.float32),
        bn2_mean=0.1 * jax.random.normal(ks[4], (1, arc_feature), jnp.float32),
        bn2_var=jax.random.uniform(ks[5], (1, arc_feature), jnp.float32,
                                   minval=0.5, maxval=1.5),
        # nn.Linear(ArcFeature, num_classes): stored transposed as (in, out)
        fc2_w=jax.random.normal(ks[6], (arc_feature, num_classes), jnp.float32) * 0.1,
        fc2_b=jax.random.normal(ks[7], (1, num_classes), jnp.float32) * 0.1,
    )


if __name__ == "__main__":
    key = jax.random.PRNGKey(0)
    kx, kp = jax.random.split(key)

    # Small shapes consistent with the module (feature channels, ArcFeature,
    # num_classes scaled down from 1280/512/1000 to TPU-friendly sizes).
    B, C, H, W = 2, 256, 4, 4       # backbone feature map (B, feature, H', W')
    ARC_FEATURE = 128
    NUM_CLASSES = 256

    features = jax.random.normal(kx, (B, C, H, W), jnp.float32)
    params = make_params(kp, C, ARC_FEATURE, NUM_CLASSES)

    # block_n=128 so the demo exercises a 2-tile class grid; batch pads 2 -> 8.
    fwd = jax.jit(functools.partial(arc_efficientnet_forward, block_n=128))
    logits, embedding = fwd(features, params)
    jax.block_until_ready((logits, embedding))

    # Pure-JAX fp32 reference of the head (bf16 kernel operands => loose tol).
    pooled = features.mean(axis=(2, 3))
    emb_ref = pooled @ params["fc_w"] + params["fc_b"]
    h_ref = ((emb_ref - params["bn2_mean"])
             / jnp.sqrt(params["bn2_var"] + BN_EPS)
             * params["bn2_gamma"] + params["bn2_beta"])
    logits_ref = h_ref @ params["fc2_w"] + params["fc2_b"]

    assert logits.shape == (B, NUM_CLASSES) and embedding.shape == (B, ARC_FEATURE)
    assert jnp.allclose(embedding, emb_ref, atol=2e-2, rtol=2e-2), (
        float(jnp.max(jnp.abs(embedding - emb_ref))))
    assert jnp.allclose(logits, logits_ref, atol=2e-2, rtol=2e-2), (
        float(jnp.max(jnp.abs(logits - logits_ref))))

    print("KERNEL_OK")
</pallas_src>

<mosaic_0001>
module attributes {stable_mosaic.version = 11 : i64} {
  func.func @_emb_kernel(%arg0: i32, %arg1: memref<8x256xbf16, #tpu.memory_space<vmem>>, %arg2: memref<256x128xbf16, #tpu.memory_space<vmem>>, %arg3: memref<1x128xf32, #tpu.memory_space<vmem>>, %arg4: memref<8x128xf32, #tpu.memory_space<vmem>>, %arg5: memref<8x128xbf16, #tpu.memory_space<vmem>>) attributes {dimension_semantics = [#tpu.dimension_semantics<parallel>], iteration_bounds = array<i64: 1>, scalar_prefetch = 0 : i64, scratch_operands = 0 : i64, tpu.core_type = #tpu.core_type<tc>, window_params = [{transform_indices = @transform_0, window_bounds = array<i64: 8, 256>}, {pipeline_mode = #tpu.pipeline_mode<synchronous>, transform_indices = @transform_1, window_bounds = array<i64: 256, 128>}, {pipeline_mode = #tpu.pipeline_mode<synchronous>, transform_indices = @transform_2, window_bounds = array<i64: 1, 128>}, {transform_indices = @transform_3, window_bounds = array<i64: 8, 128>}, {transform_indices = @transform_4, window_bounds = array<i64: 8, 128>}]} {
    %c0 = arith.constant 0 : index
    %c0_0 = arith.constant 0 : index
    %0 = vector.load %arg1[%c0, %c0_0] : memref<8x256xbf16, #tpu.memory_space<vmem>>, vector<8x256xbf16>
    %c0_1 = arith.constant 0 : index
    %c0_2 = arith.constant 0 : index
    %1 = vector.load %arg2[%c0_1, %c0_2] : memref<256x128xbf16, #tpu.memory_space<vmem>>, vector<256x128xbf16>
    %cst = arith.constant dense<0.000000e+00> : vector<8x128xf32>
    %2 = tpu.matmul %0, %1, %cst {dimension_numbers = #tpu.dot_dimension_numbers<[1], [0], [0], [1], [0, 0, 1, 1], [], []>} : vector<8x256xbf16>, vector<256x128xbf16>, vector<8x128xf32> -> vector<8x128xf32>
    %c0_3 = arith.constant 0 : index
    %c0_4 = arith.constant 0 : index
    %3 = vector.load %arg3[%c0_3, %c0_4] : memref<1x128xf32, #tpu.memory_space<vmem>>, vector<1x128xf32>
    %4 = vector.broadcast %3 : vector<1x128xf32> to vector<8x128xf32>
    %5 = arith.addf %2, %4 : vector<8x128xf32>
    %c0_5 = arith.constant 0 : index
    %c0_6 = arith.constant 0 : index
    %6 = vector.load %arg4[%c0_5, %c0_6] : memref<8x128xf32, #tpu.memory_space<vmem>>, vector<8x128xf32>
    tpu.vector_store %arg4[%c0_5, %c0_6], %5 {strides = array<i32>} : memref<8x128xf32, #tpu.memory_space<vmem>>, vector<8x128xf32>,
    %7 = arith.truncf %5 : vector<8x128xf32> to vector<8x128xbf16>
    %c0_7 = arith.constant 0 : index
    %c0_8 = arith.constant 0 : index
    %8 = vector.load %arg5[%c0_7, %c0_8] : memref<8x128xbf16, #tpu.memory_space<vmem>>, vector<8x128xbf16>
    tpu.vector_store %arg5[%c0_7, %c0_8], %7 {strides = array<i32>} : memref<8x128xbf16, #tpu.memory_space<vmem>>, vector<8x128xbf16>,
    return
  }
  func.func @transform_0(%arg0: i32) -> (i32, i32) {
    %c0_i32 = arith.constant 0 : i32
    %c0_i32_0 = arith.constant 0 : i32
    return %arg0, %c0_i32 : i32, i32
  }
  func.func @transform_1(%arg0: i32) -> (i32, i32) {
    %c0_i32 = arith.constant 0 : i32
    %c0_i32_0 = arith.constant 0 : i32
    %c0_i32_1 = arith.constant 0 : i32
    return %c0_i32, %c0_i32_0 : i32, i32
  }
  func.func @transform_2(%arg0: i32) -> (i32, i32) {
    %c0_i32 = arith.constant 0 : i32
    %c0_i32_0 = arith.constant 0 : i32
    %c0_i32_1 = arith.constant 0 : i32
    return %c0_i32, %c0_i32_0 : i32, i32
  }
  func.func @transform_3(%arg0: i32) -> (i32, i32) {
    %c0_i32 = arith.constant 0 : i32
    %c0_i32_0 = arith.constant 0 : i32
    return %arg0, %c0_i32 : i32, i32
  }
  func.func @transform_4(%arg0: i32) -> (i32, i32) {
    %c0_i32 = arith.constant 0 : i32
    %c0_i32_0 = arith.constant 0 : i32
    return %arg0, %c0_i32 : i32, i32
  }
}

module attributes {stable_mosaic.version = 11 : i64} {
  func.func @_logits_kernel(%arg0: i32, %arg1: i32, %arg2: memref<8x128xbf16, #tpu.memory_space<vmem>>, %arg3: memref<128x128xbf16, #tpu.memory_space<vmem>>, %arg4: memref<1x128xf32, #tpu.memory_space<vmem>>, %arg5: memref<8x128xf32, #tpu.memory_space<vmem>>) attributes {dimension_semantics = [#tpu.dimension_semantics<parallel>, #tpu.dimension_semantics<parallel>], iteration_bounds = array<i64: 1, 2>, scalar_prefetch = 0 : i64, scratch_operands = 0 : i64, tpu.core_type = #tpu.core_type<tc>, window_params = [{transform_indices = @transform_0, window_bounds = array<i64: 8, 128>}, {transform_indices = @transform_1, window_bounds = array<i64: 128, 128>}, {transform_indices = @transform_2, window_bounds = array<i64: 1, 128>}, {transform_indices = @transform_3, window_bounds = array<i64: 8, 128>}]} {
    %c0 = arith.constant 0 : index
    %c0_0 = arith.constant 0 : index
    %0 = vector.load %arg2[%c0, %c0_0] : memref<8x128xbf16, #tpu.memory_space<vmem>>, vector<8x128xbf16>
    %c0_1 = arith.constant 0 : index
    %c0_2 = arith.constant 0 : index
    %1 = vector.load %arg3[%c0_1, %c0_2] : memref<128x128xbf16, #tpu.memory_space<vmem>>, vector<128x128xbf16>
    %cst = arith.constant dense<0.000000e+00> : vector<8x128xf32>
    %2 = tpu.matmul %0, %1, %cst {dimension_numbers = #tpu.dot_dimension_numbers<[1], [0], [0], [1], [0, 0, 1, 1], [], []>} : vector<8x128xbf16>, vector<128x128xbf16>, vector<8x128xf32> -> vector<8x128xf32>
    %c0_3 = arith.constant 0 : index
    %c0_4 = arith.constant 0 : index
    %3 = vector.load %arg4[%c0_3, %c0_4] : memref<1x128xf32, #tpu.memory_space<vmem>>, vector<1x128xf32>
    %4 = vector.broadcast %3 : vector<1x128xf32> to vector<8x128xf32>
    %5 = arith.addf %2, %4 : vector<8x128xf32>
    %c0_5 = arith.constant 0 : index
    %c0_6 = arith.constant 0 : index
    %6 = vector.load %arg5[%c0_5, %c0_6] : memref<8x128xf32, #tpu.memory_space<vmem>>, vector<8x128xf32>
    tpu.vector_store %arg5[%c0_5, %c0_6], %5 {strides = array<i32>} : memref<8x128xf32, #tpu.memory_space<vmem>>, vector<8x128xf32>,
    return
  }
  func.func @transform_0(%arg0: i32, %arg1: i32) -> (i32, i32) {
    %c0_i32 = arith.constant 0 : i32
    %c0_i32_0 = arith.constant 0 : i32
    return %arg0, %c0_i32 : i32, i32
  }
  func.func @transform_1(%arg0: i32, %arg1: i32) -> (i32, i32) {
    %c0_i32 = arith.constant 0 : i32
    %c0_i32_0 = arith.constant 0 : i32
    return %c0_i32, %arg1 : i32, i32
  }
  func.func @transform_2(%arg0: i32, %arg1: i32) -> (i32, i32) {
    %c0_i32 = arith.constant 0 : i32
    %c0_i32_0 = arith.constant 0 : i32
    return %c0_i32, %arg1 : i32, i32
  }
  func.func @transform_3(%arg0: i32, %arg1: i32) -> (i32, i32) {
    %c0_i32 = arith.constant 0 : i32
    return %arg0, %arg1 : i32, i32
  }
}

</mosaic_0001>

<llo_original>
// kernel: arc_efficientnet_forward.2
$region0: #{arc_efficientnet_forward.2}
  #allocation0 [shape = 'u32[]', space=smem, size = 0x4, offset = 0x4, fixed_abs, tag = 'smem constant byte address 0x4 - core index']
  #allocation1 [shape = 'u32[144,128]{1,0:T(1,128)}', space=vmem, size = 0x12000, scoped, tag = 'internal scratch']
  %s0 = inlined_call_operand.hbm [shape: bf16[8,256], index: 0, kind: input, shape index: {}]
  %s1 = inlined_call_operand.hbm [shape: bf16[256,128], index: 1, kind: input, shape index: {}]
  %s2 = inlined_call_operand.hbm [shape: f32[1,128], index: 2, kind: input, shape index: {}]
  %s3 = inlined_call_operand.hbm [shape: f32[8,128], index: 3, kind: output, shape index: {0}]
  %s4 = inlined_call_operand.hbm [shape: bf16[8,128], index: 4, kind: output, shape index: {1}]
  %5 = xla_tuple %s3, %s4
  %s6 = sld [smem:[#allocation0]]
  $region42: #{arc_efficientnet_forward.2} parent=0
    _
  %s8 = ssub.s32 1, %s6
  %s9 = scalar_select 0, %s8, %s6
  $region1: #{arc_efficientnet_forward.2} parent=0
    #allocation2 [shape = 'u8[4096]{0}', space=vmem, size = 0x1000, scoped, tag = 'input window, operand 0, single buffered']
    #allocation3 [shape = 's32[1]{0}', space=sflag, size = 0x4, scoped, tag = 'scoped memory for arc_efficientnet_forward.2']
    #allocation4 [shape = 's32[1]{0}', space=sflag, size = 0x4, scoped, tag = 'scoped memory for arc_efficientnet_forward.2']
    #allocation5 [shape = 'u8[65536]{0}', space=vmem, size = 0x10000, scoped, tag = 'input window, operand 1, single buffered']
    #allocation6 [shape = 's32[1]{0}', space=sflag, size = 0x4, scoped, tag = 'scoped memory for arc_efficientnet_forward.2']
    #allocation7 [shape = 'u8[512]{0}', space=vmem, size = 0x400, scoped, tag = 'input window, operand 2, single buffered']
    #allocation8 [shape = 'u8[4096]{0}', space=vmem, size = 0x1000, scoped, tag = 'output window, operand 0, single buffered']
    #allocation9 [shape = 'u8[2048]{0}', space=vmem, size = 0x800, scoped, tag = 'output window, operand 1, single buffered']
    #allocation10 [shape = 's32[1]{0}', space=sflag, size = 0x4, scoped, tag = 'scoped memory for arc_efficientnet_forward.2']
    %10 = vsyncpa [#allocation3], 0
    %11 = vsyncpa [#allocation6], 0
    %12 = vsyncpa [#allocation4], 0
    %13 = vsyncpa [#allocation10], 0
    // Predicated region
    $region2: #{arc_efficientnet_forward.2} parent=1 // pred_check
      _
    $region3: #{arc_efficientnet_forward.2} parent=1 // pred_check_branch
      %15 = sbr.rel (0) target = $region5
    $region4: #{arc_efficientnet_forward.2} parent=1 // pred_region
      %s17 = ssub.s32 128, 128
      %18 = vsyncadd [#allocation3], %s17
      %s20 = sshll.u32 [#allocation2], 4
      %s21 = int_to_ptr.vmem [resolvable:$true] %s20
      %23 = dma.hbm_to_vmem [thread:$0]  %s0, 128, %s21, [#allocation3]
    $region5: #{arc_efficientnet_forward.2} parent=1 // pred_fallthru
      _
    // Predicated region
    $region6: #{arc_efficientnet_forward.2} parent=1 // pred_check
      _
    $region7: #{arc_efficientnet_forward.2} parent=1 // pred_check_branch
      %25 = sbr.rel (0) target = $region9
    $region8: #{arc_efficientnet_forward.2} parent=1 // pred_region
      %s27 = ssub.s32 2048, 2048
      %28 = vsyncadd [#allocation6], %s27
      %s29 = sshll.u32 [#allocation5], 4
      %s30 = int_to_ptr.vmem [resolvable:$true] %s29
      %35 = dma.hbm_to_vmem [thread:$0]  %s1, 2048, %s30, [#allocation6], 64, 64, 4
    $region9: #{arc_efficientnet_forward.2} parent=1 // pred_fallthru
      _
    // Predicated region
    $region10: #{arc_efficientnet_forward.2} parent=1 // pred_check
      _
    $region11: #{arc_efficientnet_forward.2} parent=1 // pred_check_branch
      %37 = sbr.rel (0) target = $region13
    $region12: #{arc_efficientnet_forward.2} parent=1 // pred_region
      %s39 = ssub.s32 16, 16
      %40 = vsyncadd [#allocation6], %s39
      %s42 = sshll.u32 [#allocation7], 4
      %s43 = int_to_ptr.vmem [resolvable:$true] %s42
      %45 = dma.hbm_to_vmem [thread:$0]  %s2, 16, %s43, [#allocation6]
    $region13: #{arc_efficientnet_forward.2} parent=1 // pred_fallthru
      _
    // Predicated region
    $region14: #{arc_efficientnet_forward.2} parent=1 // pred_check
      _
    $region15: #{arc_efficientnet_forward.2} parent=1 // pred_check_branch
      %47 = sbr.rel (0) target = $region17
    $region16: #{arc_efficientnet_forward.2} parent=1 // pred_region
      %48 = dma.done [#allocation3], 128
    $region17: #{arc_efficientnet_forward.2} parent=1 // pred_fallthru
      _
    // Predicated region
    $region18: #{arc_efficientnet_forward.2} parent=1 // pred_check
      _
    $region19: #{arc_efficientnet_forward.2} parent=1 // pred_check_branch
      %50 = sbr.rel (0) target = $region21
    $region20: #{arc_efficientnet_forward.2} parent=1 // pred_region
      %51 = dma.done [#allocation6], 2048
    $region21: #{arc_efficientnet_forward.2} parent=1 // pred_fallthru
      _
    // Predicated region
    $region22: #{arc_efficientnet_forward.2} parent=1 // pred_check
      _
    $region23: #{arc_efficientnet_forward.2} parent=1 // pred_check_branch
      %53 = sbr.rel (0) target = $region25
    $region24: #{arc_efficientnet_forward.2} parent=1 // pred_region
      %54 = dma.done [#allocation6], 16
    $region25: #{arc_efficientnet_forward.2} parent=1 // pred_fallthru
      _
    %v56 = vld [vmem:[#allocation2] sm:$0xff]
    %v57 = vld [vmem:[#allocation5] sm:$0xf]
    %v58 = vld [vmem:[#allocation5 + $0x4] sm:$0xf]
    %v59 = vld [vmem:[#allocation5 + $0x8] sm:$0xf]
    %v60 = vld [vmem:[#allocation5 + $0xc] sm:$0xf]
    %v61 = vld [vmem:[#allocation5 + $0x10] sm:$0xf]
    %v62 = vld [vmem:[#allocation5 + $0x14] sm:$0xf]
    %v63 = vld [vmem:[#allocation5 + $0x18] sm:$0xf]
    %v64 = vld [vmem:[#allocation5 + $0x1c] sm:$0xf]
    %v65 = vld [vmem:[#allocation5 + $0x20] sm:$0xf]
    %v66 = vld [vmem:[#allocation5 + $0x24] sm:$0xf]
    %v67 = vld [vmem:[#allocation5 + $0x28] sm:$0xf]
    %v68 = vld [vmem:[#allocation5 + $0x2c] sm:$0xf]
    %v69 = vld [vmem:[#allocation5 + $0x30] sm:$0xf]
    %v70 = vld [vmem:[#allocation5 + $0x34] sm:$0xf]
    %v71 = vld [vmem:[#allocation5 + $0x38] sm:$0xf]
    %v72 = vld [vmem:[#allocation5 + $0x3c] sm:$0xf]
    %v73 = vld [vmem:[#allocation5 + $0x40] sm:$0xf]
    %v74 = vld [vmem:[#allocation5 + $0x44] sm:$0xf]
    %v75 = vld [vmem:[#allocation5 + $0x48] sm:$0xf]
    %v76 = vld [vmem:[#allocation5 + $0x4c] sm:$0xf]
    %v77 = vld [vmem:[#allocation5 + $0x50] sm:$0xf]
    %v78 = vld [vmem:[#allocation5 + $0x54] sm:$0xf]
    %v79 = vld [vmem:[#allocation5 + $0x58] sm:$0xf]
    %v80 = vld [vmem:[#allocation5 + $0x5c] sm:$0xf]
    %v81 = vld [vmem:[#allocation5 + $0x60] sm:$0xf]
    %v82 = vld [vmem:[#allocation5 + $0x64] sm:$0xf]
    %v83 = vld [vmem:[#allocation5 + $0x68] sm:$0xf]
    %v84 = vld [vmem:[#allocation5 + $0x6c] sm:$0xf]
    %v85 = vld [vmem:[#allocation5 + $0x70] sm:$0xf]
    %v86 = vld [vmem:[#allocation5 + $0x74] sm:$0xf]
    %v87 = vld [vmem:[#allocation5 + $0x78] sm:$0xf]
    %v88 = vld [vmem:[#allocation5 + $0x7c] sm:$0xf]
    %v89 = vld [vmem:[#allocation7] sm:$0x1]
    %v91 = vlaneseq
    %v92 = vshrl.u32 %v91, 7
    %v93 = vsub.s32 0, %v92
    %v94 = vrot.slane %v89, %v93
    %v97 = vunpack.c.l.b16 %v56
    %v98 = vunpack.c.h.b16 %v56
    %v99 = vpack.c.b16 %v97, %v97
    %v100 = vpack.c.b16 %v98, %v98
    %v135 = vunpack.c.l.b16 %v57
    %v136 = vunpack.c.l.b16 %v58
    %v137 = vunpack.c.l.b16 %v59
    %v138 = vunpack.c.l.b16 %v60
    %v139 = vunpack.c.l.b16 %v61
    %v140 = vunpack.c.l.b16 %v62
    %v141 = vunpack.c.l.b16 %v63
    %v142 = vunpack.c.l.b16 %v64
    %v143 = vunpack.c.l.b16 %v65
    %v144 = vunpack.c.l.b16 %v66
    %v145 = vunpack.c.l.b16 %v67
    %v146 = vunpack.c.l.b16 %v68
    %v147 = vunpack.c.l.b16 %v69
    %v148 = vunpack.c.l.b16 %v70
    %v149 = vunpack.c.l.b16 %v71
    %v150 = vunpack.c.l.b16 %v72
    %v151 = vunpack.c.l.b16 %v73
    %v152 = vunpack.c.l.b16 %v74
    %v153 = vunpack.c.l.b16 %v75
    %v154 = vunpack.c.l.b16 %v76
    %v155 = vunpack.c.l.b16 %v77
    %v156 = vunpack.c.l.b16 %v78
    %v157 = vunpack.c.l.b16 %v79
    %v158 = vunpack.c.l.b16 %v80
    %v159 = vunpack.c.l.b16 %v81
    %v160 = vunpack.c.l.b16 %v82
    %v161 = vunpack.c.l.b16 %v83
    %v162 = vunpack.c.l.b16 %v84
    %v163 = vunpack.c.l.b16 %v85
    %v164 = vunpack.c.l.b16 %v86
    %v165 = vunpack.c.l.b16 %v87
    %v166 = vunpack.c.l.b16 %v88
    %v167 = vpack.c.b16 %v136, %v135
    %v168 = vpack.c.b16 %v138, %v137
    %v169 = vpack.c.b16 %v140, %v139
    %v170 = vpack.c.b16 %v142, %v141
    %v171 = vpack.c.b16 %v144, %v143
    %v172 = vpack.c.b16 %v146, %v145
    %v173 = vpack.c.b16 %v148, %v147
    %v174 = vpack.c.b16 %v150, %v149
    %v175 = vpack.c.b16 %v152, %v151
    %v176 = vpack.c.b16 %v154, %v153
    %v177 = vpack.c.b16 %v156, %v155
    %v178 = vpack.c.b16 %v158, %v157
    %v179 = vpack.c.b16 %v160, %v159
    %v180 = vpack.c.b16 %v162, %v161
    %v181 = vpack.c.b16 %v164, %v163
    %v182 = vpack.c.b16 %v166, %v165
    %199 = vmatprep.subr.bf16.mxu0 0
    %200 = vmatpush1.bf16.msra.mxu0 %v167
    %201 = vmatprep.subr.bf16.mxu0 0
    %202 = vmatpush1.bf16.msra.mxu0 %v168
    %203 = vmatprep.subr.bf16.mxu0 0
    %204 = vmatpush1.bf16.msra.mxu0 %v169
    %205 = vmatprep.subr.bf16.mxu0 0
    %206 = vmatpush1.bf16.msra.mxu0 %v170
    %207 = vmatprep.subr.bf16.mxu0 0
    %208 = vmatpush1.bf16.msra.mxu0 %v171
    %209 = vmatprep.subr.bf16.mxu0 0
    %210 = vmatpush1.bf16.msra.mxu0 %v172
    %211 = vmatprep.subr.bf16.mxu0 0
    %212 = vmatpush1.bf16.msra.mxu0 %v173
    %213 = vmatprep.subr.bf16.mxu0 0
    %214 = vmatpush1.bf16.msra.mxu0 %v174
    %215 = vmatprep.subr.bf16.mxu0 0
    %216 = vmatpush1.bf16.msra.mxu0 %v175
    %217 = vmatprep.subr.bf16.mxu0 0
    %218 = vmatpush1.bf16.msra.mxu0 %v176
    %219 = vmatprep.subr.bf16.mxu0 0
    %220 = vmatpush1.bf16.msra.mxu0 %v177
    %221 = vmatprep.subr.bf16.mxu0 0
    %222 = vmatpush1.bf16.msra.mxu0 %v178
    %223 = vmatprep.subr.bf16.mxu0 0
    %224 = vmatpush1.bf16.msra.mxu0 %v179
    %225 = vmatprep.subr.bf16.mxu0 0
    %226 = vmatpush1.bf16.msra.mxu0 %v180
    %227 = vmatprep.subr.bf16.mxu0 0
    %228 = vmatpush1.bf16.msra.mxu0 %v181
    %229 = vmatprep.subr.bf16.mxu0 0
    %230 = vmatpush1.bf16.msra.mxu0 %v182
    %231 = vmatprep.mubr.bf16.mxu0 %v100
    %232 = vmatmul.mubr.bf16.gmra.mrb[0].mxu0 %v99
    %v233 = vpop.f32.mrb[0].mxu0
    %v234 = vadd.f32 %v94, %v233
    %v235 = vpop.f32.mrb[0].mxu0
    %v236 = vpop.f32.mrb[0].mxu0
    %v237 = vpop.f32.mrb[0].mxu0
    %238 = vdwg.mxu0
    %239 = vst [vmem:[#allocation8] sm:$0xff] %v234
    %v240 = vpack.c.bf16 %v234, %v234
    %241 = vst [vmem:[#allocation9] sm:$0xf] %v240
    // Predicated region
    $region26: #{arc_efficientnet_forward.2} parent=1 // pred_check
      _
    $region27: #{arc_efficientnet_forward.2} parent=1 // pred_check_branch
      %243 = sbr.rel (0) target = $region29
    $region28: #{arc_efficientnet_forward.2} parent=1 // pred_region
      %s245 = ssub.s32 128, 128
      %246 = vsyncadd [#allocation4], %s245
      %s248 = sshll.u32 [#allocation8], 4
      %s249 = int_to_ptr.vmem [resolvable:$true] %s248
      %251 = dma.vmem_to_hbm [thread:$0]  %s249, 128, %s3, [#allocation4]
    $region29: #{arc_efficientnet_forward.2} parent=1 // pred_fallthru
      _
    // Predicated region
    $region30: #{arc_efficientnet_forward.2} parent=1 // pred_check
      _
    $region31: #{arc_efficientnet_forward.2} parent=1 // pred_check_branch
      %253 = sbr.rel (0) target = $region33
    $region32: #{arc_efficientnet_forward.2} parent=1 // pred_region
      %s255 = ssub.s32 64, 64
      %256 = vsyncadd [#allocation10], %s255
      %s258 = sshll.u32 [#allocation9], 4
      %s259 = int_to_ptr.vmem [resolvable:$true] %s258
      %261 = dma.vmem_to_hbm [thread:$0]  %s259, 64, %s4, [#allocation10]
    $region33: #{arc_efficientnet_forward.2} parent=1 // pred_fallthru
      _
    // Predicated region
    $region34: #{arc_efficientnet_forward.2} parent=1 // pred_check
      _
    $region35: #{arc_efficientnet_forward.2} parent=1 // pred_check_branch
      %263 = sbr.rel (0) target = $region37
    $region36: #{arc_efficientnet_forward.2} parent=1 // pred_region
      %264 = dma.done [#allocation4], 128
    $region37: #{arc_efficientnet_forward.2} parent=1 // pred_fallthru
      _
    // Predicated region
    $region38: #{arc_efficientnet_forward.2} parent=1 // pred_check
      _
    $region39: #{arc_efficientnet_forward.2} parent=1 // pred_check_branch
      %266 = sbr.rel (0) target = $region41
    $region40: #{arc_efficientnet_forward.2} parent=1 // pred_region
      %267 = dma.done [#allocation10], 64
    $region41: #{arc_efficientnet_forward.2} parent=1 // pred_fallthru
      _
    %268 = vsyncpa [#allocation3], 1
    %269 = vsyncpa [#allocation6], 1
    %270 = vsyncpa [#allocation4], 1
    %271 = vsyncpa [#allocation10], 1

// kernel: arc_efficientnet_forward.3
$region0: #{arc_efficientnet_forward.3}
  #allocation0 [shape = 'u32[]', space=smem, size = 0x4, offset = 0x4, fixed_abs, tag = 'smem constant byte address 0x4 - core index']
  #allocation1 [shape = 'u32[144,128]{1,0:T(1,128)}', space=vmem, size = 0x12000, scoped, tag = 'internal scratch']
  %s0 = inlined_call_operand.hbm [shape: bf16[8,128], index: 0, kind: input, shape index: {}]
  %s1 = inlined_call_operand.hbm [shape: bf16[128,256], index: 1, kind: input, shape index: {}]
  %s2 = inlined_call_operand.hbm [shape: f32[1,256], index: 2, kind: input, shape index: {}]
  %s3 = inlined_call_operand.hbm [shape: f32[8,256], index: 3, kind: output, shape index: {}]
  %s4 = sld [smem:[#allocation0]]
  $region57: #{arc_efficientnet_forward.3} parent=0
    _
  %s6 = ssub.s32 1, %s4
  %s7 = scalar_select 0, %s6, %s4
  $region1: #{arc_efficientnet_forward.3} parent=0
    #allocation2 [shape = 'u8[2048]{0}', space=vmem, size = 0x800, scoped, tag = 'input window, operand 0, single buffered']
    #allocation3 [shape = 's32[2]{0}', space=sflag, size = 0x8, scoped, tag = 'scoped memory for arc_efficientnet_forward.3']
    #allocation4 [shape = 's32[2]{0}', space=sflag, size = 0x8, scoped, tag = 'scoped memory for arc_efficientnet_forward.3']
    #allocation5 [shape = 'u8[65536]{0}', space=vmem, size = 0x10000, scoped, tag = 'input window, operand 1']
    #allocation6 [shape = 's32[2]{0}', space=sflag, size = 0x8, scoped, tag = 'scoped memory for arc_efficientnet_forward.3']
    #allocation7 [shape = 'u8[1024]{0}', space=vmem, size = 0x400, scoped, tag = 'input window, operand 2']
    #allocation8 [shape = 'u8[8192]{0}', space=vmem, size = 0x2000, scoped, tag = 'output window, operand 0']
    %8 = vsyncpa [#allocation3], 0
    %9 = vsyncpa [#allocation6], 0
    %s10 = scalar_lea.sflag [#allocation6], 1
    %11 = vsyncpa %s10, 0
    %12 = vsyncpa [#allocation4], 0
    %s13 = scalar_lea.sflag [#allocation4], 1
    %14 = vsyncpa %s13, 0
    loop: start=0, step=1, limit=4
    $region2: #{arc_efficientnet_forward.3} parent=1 // loop_pre_header
      _
    $region3: #{arc_efficientnet_forward.3} parent=1 // loop_header
      %s16 = sphi 0, %s20
      %p17 = scmp.ge.s32.totalorder %s16, 4
      %s23 = sphi 0, %s35
      %s24 = sphi 0, %s31
      %s25 = sphi 0, %s23
      %s26 = sphi 0, %s24
      %s27 = sphi 0, %s25
      %s28 = sphi 0, %s26
      %s38 = sphi 0, %s40
      %s41 = sphi 0, %s38
      %s42 = sphi 0, %s41
      %s58 = sphi 0, %s42
      %s64 = sphi 0, %s66
      %s67 = sphi 0, %s64
      %s68 = sphi 0, %s67
      %s84 = sphi 0, %s68
      %s90 = sphi 0, %s92
      %s93 = sphi 0, %s90
      %s94 = sphi 0, %s93
      %s110 = sphi 0, %s94
      %s118 = sphi 0, %s120
      %s121 = sphi 0, %s118
      %s122 = sphi 0, %s121
      %s138 = sphi 0, %s122
    $region4: #{arc_efficientnet_forward.3} parent=1 // loop_header_branch
      %19 = sbr.rel (%p17) target = $region8
    $region5: #{arc_efficientnet_forward.3} parent=1 // loop_body
      %s21 = ssub.s32 %s16, 1
      %s22 = ssub.s32 %s16, 2
      %s29 = sadd.s32 1, %s24
      %p30 = scmp.ge.s32.totalorder %s29, 2
      %s31 = scalar_select %p30, 0, %s29
      %s32 = sadd.s32 1, %s23
      %s33 = scalar_select %p30, %s32, %s23
      %p34 = scmp.ge.s32.totalorder %s33, 1
      %s35 = scalar_select %p34, 0, %s33
      %s36 = ssub.s32 %s23, %s35
      %p37 = scmp.eq.s32.totalorder %s36, 0
      %s39 = sadd.s32 %s38, 1
      %s40 = scalar_select %p37, %s38, %s39
      %p43 = pneg %p37
      %p44 = scmp.eq.s32.totalorder %s16, 1
      %p45 = por %p43, %p44
      %p46 = scmp.ne.s32.totalorder %s38, %s41
      %p47 = scmp.eq.s32.totalorder %s16, 0
      %p48 = por %p46, %p47
      %p49 = scmp.ne.s32.totalorder %s38, %s41
      %p50 = scmp.eq.s32.totalorder %s21, 1
      %p51 = por %p49, %p50
      %p52 = scmp.ne.s32.totalorder %s41, %s42
      %p53 = scmp.eq.s32.totalorder %s21, 0
      %p54 = por %p52, %p53
      %p55 = scmp.ne.s32.totalorder %s41, %s42
      %p56 = scmp.eq.s32.totalorder %s22, 1
      %p57 = por %p55, %p56
      %p59 = scmp.ne.s32.totalorder %s42, %s58
      %p60 = scmp.eq.s32.totalorder %s22, 0
      %p61 = por %p59, %p60
      %s62 = ssub.s32 %s24, %s31
      %p63 = scmp.eq.s32.totalorder %s62, 0
      %s65 = sadd.s32 %s64, 1
      %s66 = scalar_select %p63, %s64, %s65
      %p69 = pneg %p63
      %p70 = scmp.eq.s32.totalorder %s16, 1
      %p71 = por %p69, %p70
      %p72 = scmp.ne.s32.totalorder %s64, %s67
      %p73 = scmp.eq.s32.totalorder %s16, 0
      %p74 = por %p72, %p73
      %p75 = scmp.ne.s32.totalorder %s64, %s67
      %p76 = scmp.eq.s32.totalorder %s21, 1
      %p77 = por %p75, %p76
      %p78 = scmp.ne.s32.totalorder %s67, %s68
      %p79 = scmp.eq.s32.totalorder %s21, 0
      %p80 = por %p78, %p79
      %p81 = scmp.ne.s32.totalorder %s67, %s68
      %p82 = scmp.eq.s32.totalorder %s22, 1
      %p83 = por %p81, %p82
      %p85 = scmp.ne.s32.totalorder %s68, %s84
      %p86 = scmp.eq.s32.totalorder %s22, 0
      %p87 = por %p85, %p86
      %s88 = ssub.s32 %s24, %s31
      %p89 = scmp.eq.s32.totalorder %s88, 0
      %s91 = sadd.s32 %s90, 1
      %s92 = scalar_select %p89, %s90, %s91
      %p95 = pneg %p89
      %p96 = scmp.eq.s32.totalorder %s16, 1
      %p97 = por %p95, %p96
      %p98 = scmp.ne.s32.totalorder %s90, %s93
      %p99 = scmp.eq.s32.totalorder %s16, 0
      %p100 = por %p98, %p99
      %p101 = scmp.ne.s32.totalorder %s90, %s93
      %p102 = scmp.eq.s32.totalorder %s21, 1
      %p103 = por %p101, %p102
      %p104 = scmp.ne.s32.totalorder %s93, %s94
      %p105 = scmp.eq.s32.totalorder %s21, 0
      %p106 = por %p104, %p105
      %p107 = scmp.ne.s32.totalorder %s93, %s94
      %p108 = scmp.eq.s32.totalorder %s22, 1
      %p109 = por %p107, %p108
      %p111 = scmp.ne.s32.totalorder %s94, %s110
      %p112 = scmp.eq.s32.totalorder %s22, 0
      %p113 = por %p111, %p112
      %s114 = ssub.s32 %s23, %s35
      %s115 = ssub.s32 %s24, %s31
      %s116 = sor.u32 %s114, %s115
      %p117 = scmp.eq.s32.totalorder %s116, 0
      %s119 = sadd.s32 %s118, 1
      %s120 = scalar_select %p117, %s118, %s119
      %p123 = pneg %p117
      %p124 = scmp.eq.s32.totalorder %s16, 1
      %p125 = por %p123, %p124
      %p126 = scmp.ne.s32.totalorder %s118, %s121
      %p127 = scmp.eq.s32.totalorder %s16, 0
      %p128 = por %p126, %p127
      %p129 = scmp.ne.s32.totalorder %s118, %s121
      %p130 = scmp.eq.s32.totalorder %s21, 1
      %p131 = por %p129, %p130
      %p132 = scmp.ne.s32.totalorder %s121, %s122
      %p133 = scmp.eq.s32.totalorder %s21, 0
      %p134 = por %p132, %p133
      %p135 = scmp.ne.s32.totalorder %s121, %s122
      %p136 = scmp.eq.s32.totalorder %s22, 1
      %p137 = por %p135, %p136
      %p139 = scmp.ne.s32.totalorder %s122, %s138
      %p140 = scmp.eq.s32.totalorder %s22, 0
      %p141 = por %p139, %p140
      %p142 = scmp.le.s32.totalorder 1, %s16
      %p143 = scmp.lt.s32.totalorder %s16, 3
      %p144 = pnand %p142, %p143
      %p145 = pneg %p144
      // Predicated region
      $region9: #{arc_efficientnet_forward.3} parent=5 // pred_check
        _
      $region10: #{arc_efficientnet_forward.3} parent=5 // pred_check_branch
        %147 = sbr.rel (%p144) target = $region12
      $region11: #{arc_efficientnet_forward.3} parent=5 // pred_region
        %s148 = ssub.s32 %s16, 1
        // Predicated region
        $region13: #{arc_efficientnet_forward.3} parent=11 // pred_check
          %p149 = pneg %p54
        $region14: #{arc_efficientnet_forward.3} parent=11 // pred_check_branch
          %151 = sbr.rel (%p149) target = $region16
        $region15: #{arc_efficientnet_forward.3} parent=11 // pred_region
          %s153 = ssub.s32 64, 64
          %154 = vsyncadd [#allocation3], %s153
          %s155 = smul.addr %s25, 64
          %s156 = scalar_lea.hbm %s0, %s155
          %s158 = sshll.u32 [#allocation2], 4
          %s159 = int_to_ptr.vmem [resolvable:$true] %s158
          %161 = dma.hbm_to_vmem [thread:$0]  %s156, 64, %s159, [#allocation3]
        $region16: #{arc_efficientnet_forward.3} parent=11 // pred_fallthru
          _
      $region12: #{arc_efficientnet_forward.3} parent=5 // pred_fallthru
        _
      %p162 = scmp.lt.s32.totalorder %s16, 2
      // Predicated region
      $region17: #{arc_efficientnet_forward.3} parent=5 // pred_check
        %p163 = pneg %p162
      $region18: #{arc_efficientnet_forward.3} parent=5 // pred_check_branch
        %165 = sbr.rel (%p163) target = $region20
      $region19: #{arc_efficientnet_forward.3} parent=5 // pred_region
        // Predicated region
        $region21: #{arc_efficientnet_forward.3} parent=19 // pred_check
          %p166 = pneg %p74
        $region22: #{arc_efficientnet_forward.3} parent=19 // pred_check_branch
          %168 = sbr.rel (%p166) target = $region24
        $region23: #{arc_efficientnet_forward.3} parent=19 // pred_region
          %s169 = sand.u32 %s16, 1
          %s170 = scalar_lea.sflag [#allocation6], %s169
          %s171 = sand.u32 %s64, 1
          %s172 = smul.addr %s171, 64
          %s173 = scalar_lea.vmem [#allocation5], %s172
          %s175 = ssub.s32 1024, 1024
          %176 = vsyncadd %s170, %s175
          %s177 = smul.addr %s24, 64
          %s178 = scalar_lea.hbm %s1, %s177
          %s179 = sshll.u32 %s173, 4
          %s180 = int_to_ptr.vmem [resolvable:$true] %s179
          %185 = dma.hbm_to_vmem [thread:$0]  %s178, 1024, %s180, %s170, 128, 64, 4
        $region24: #{arc_efficientnet_forward.3} parent=19 // pred_fallthru
          _
        // Predicated region
        $region25: #{arc_efficientnet_forward.3} parent=19 // pred_check
          %p186 = pneg %p100
        $region26: #{arc_efficientnet_forward.3} parent=19 // pred_check_branch
          %188 = sbr.rel (%p186) target = $region28
        $region27: #{arc_efficientnet_forward.3} parent=19 // pred_region
          %s189 = sand.u32 %s16, 1
          %s190 = scalar_lea.sflag [#allocation6], %s189
          %s191 = sand.u32 %s90, 1
          %s192 = scalar_lea.vmem [#allocation7], %s191
          %s194 = ssub.s32 16, 16
          %195 = vsyncadd %s190, %s194
          %s196 = smul.addr %s24, 16
          %s197 = scalar_lea.hbm %s2, %s196
          %s199 = sshll.u32 %s192, 4
          %s200 = int_to_ptr.vmem [resolvable:$true] %s199
          %202 = dma.hbm_to_vmem [thread:$0]  %s197, 16, %s200, %s190
        $region28: #{arc_efficientnet_forward.3} parent=19 // pred_fallthru
          _
      $region20: #{arc_efficientnet_forward.3} parent=5 // pred_fallthru
        _
      %p203 = scmp.le.s32.totalorder 1, %s16
      %p204 = scmp.lt.s32.totalorder %s16, 3
      %p205 = pnand %p203, %p204
      %p206 = pneg %p205
      // Predicated region
      $region29: #{arc_efficientnet_forward.3} parent=5 // pred_check
        _
      $region30: #{arc_efficientnet_forward.3} parent=5 // pred_check_branch
        %208 = sbr.rel (%p205) target = $region32
      $region31: #{arc_efficientnet_forward.3} parent=5 // pred_region
        %s209 = ssub.s32 %s16, 1
        // Predicated region
        $region33: #{arc_efficientnet_forward.3} parent=31 // pred_check
          %p210 = pneg %p54
        $region34: #{arc_efficientnet_forward.3} parent=31 // pred_check_branch
          %212 = sbr.rel (%p210) target = $region36
        $region35: #{arc_efficientnet_forward.3} parent=31 // pred_region
          %213 = dma.done [#allocation3], 64
        $region36: #{arc_efficientnet_forward.3} parent=31 // pred_fallthru
          _
        %s214 = sand.u32 %s21, 1
        %s215 = scalar_lea.sflag [#allocation6], %s214
        %s216 = sand.u32 %s67, 1
        %s217 = smul.addr %s216, 64
        %s218 = scalar_lea.vmem [#allocation5], %s217
        // Predicated region
        $region37: #{arc_efficientnet_forward.3} parent=31 // pred_check
          %p219 = pneg %p80
        $region38: #{arc_efficientnet_forward.3} parent=31 // pred_check_branch
          %221 = sbr.rel (%p219) target = $region40
        $region39: #{arc_efficientnet_forward.3} parent=31 // pred_region
          %222 = dma.done %s215, 1024
        $region40: #{arc_efficientnet_forward.3} parent=31 // pred_fallthru
          _
        %s223 = sand.u32 %s21, 1
        %s224 = scalar_lea.sflag [#allocation6], %s223
        %s225 = sand.u32 %s93, 1
        %s226 = scalar_lea.vmem [#allocation7], %s225
        // Predicated region
        $region41: #{arc_efficientnet_forward.3} parent=31 // pred_check
          %p227 = pneg %p106
        $region42: #{arc_efficientnet_forward.3} parent=31 // pred_check_branch
          %229 = sbr.rel (%p227) target = $region44
        $region43: #{arc_efficientnet_forward.3} parent=31 // pred_region
          %230 = dma.done %s224, 16
        $region44: #{arc_efficientnet_forward.3} parent=31 // pred_fallthru
          _
        %p231 = pneg %p54
        %p232 = pneg %p51
        %s233 = sand.u32 %s21, 1
        %s234 = scalar_lea.sflag [#allocation6], %s233
        %s235 = sand.u32 %s67, 1
        %s236 = smul.addr %s235, 64
        %s237 = scalar_lea.vmem [#allocation5], %s236
        %p238 = pneg %p80
        %p239 = pneg %p77
        %s240 = sand.u32 %s21, 1
        %s241 = scalar_lea.sflag [#allocation6], %s240
        %s242 = sand.u32 %s93, 1
        %s243 = scalar_lea.vmem [#allocation7], %s242
        %p244 = pneg %p106
        %p245 = pneg %p103
        %p246 = pneg %p134
        %p247 = pneg %p131
        %s248 = sand.u32 %s121, 1
        %s249 = scalar_lea.sflag [#allocation4], %s248
        %s250 = sand.u32 %s121, 1
        %s251 = smul.addr %s250, 8
        %s252 = scalar_lea.vmem [#allocation8], %s251
        %v254 = vld [vmem:[#allocation2] sm:$0xf]
        %v255 = vld [vmem:[%s218] sm:$0xf]
        %v256 = vld [vmem:[%s218 + $0x4] sm:$0xf]
        %v257 = vld [vmem:[%s218 + $0x8] sm:$0xf]
        %v258 = vld [vmem:[%s218 + $0xc] sm:$0xf]
        %v259 = vld [vmem:[%s218 + $0x10] sm:$0xf]
        %v260 = vld [vmem:[%s218 + $0x14] sm:$0xf]
        %v261 = vld [vmem:[%s218 + $0x18] sm:$0xf]
        %v262 = vld [vmem:[%s218 + $0x1c] sm:$0xf]
        %v263 = vld [vmem:[%s218 + $0x20] sm:$0xf]
        %v264 = vld [vmem:[%s218 + $0x24] sm:$0xf]
        %v265 = vld [vmem:[%s218 + $0x28] sm:$0xf]
        %v266 = vld [vmem:[%s218 + $0x2c] sm:$0xf]
        %v267 = vld [vmem:[%s218 + $0x30] sm:$0xf]
        %v268 = vld [vmem:[%s218 + $0x34] sm:$0xf]
        %v269 = vld [vmem:[%s218 + $0x38] sm:$0xf]
        %v270 = vld [vmem:[%s218 + $0x3c] sm:$0xf]
        %v271 = vld [vmem:[%s226] sm:$0x1]
        %v273 = vlaneseq
        %v274 = vshrl.u32 %v273, 7
        %v275 = vsub.s32 0, %v274
        %v276 = vrot.slane %v271, %v275
        %v294 = vunpack.c.l.b16 %v255
        %v295 = vunpack.c.l.b16 %v256
        %v296 = vunpack.c.l.b16 %v257
        %v297 = vunpack.c.l.b16 %v258
        %v298 = vunpack.c.l.b16 %v259
        %v299 = vunpack.c.l.b16 %v260
        %v300 = vunpack.c.l.b16 %v261
        %v301 = vunpack.c.l.b16 %v262
        %v302 = vunpack.c.l.b16 %v263
        %v303 = vunpack.c.l.b16 %v264
        %v304 = vunpack.c.l.b16 %v265
        %v305 = vunpack.c.l.b16 %v266
        %v306 = vunpack.c.l.b16 %v267
        %v307 = vunpack.c.l.b16 %v268
        %v308 = vunpack.c.l.b16 %v269
        %v309 = vunpack.c.l.b16 %v270
        %v310 = vpack.c.b16 %v295, %v294
        %v311 = vpack.c.b16 %v297, %v296
        %v312 = vpack.c.b16 %v299, %v298
        %v313 = vpack.c.b16 %v301, %v300
        %v314 = vpack.c.b16 %v303, %v302
        %v315 = vpack.c.b16 %v305, %v304
        %v316 = vpack.c.b16 %v307, %v306
        %v317 = vpack.c.b16 %v309, %v308
        %326 = vmatprep.subr.bf16.mxu0 0
        %327 = vmatpush1.bf16.msra.mxu0 %v310
        %328 = vmatprep.subr.bf16.mxu0 0
        %329 = vmatpush1.bf16.msra.mxu0 %v311
        %330 = vmatprep.subr.bf16.mxu0 0
        %331 = vmatpush1.bf16.msra.mxu0 %v312
        %332 = vmatprep.subr.bf16.mxu0 0
        %333 = vmatpush1.bf16.msra.mxu0 %v313
        %334 = vmatprep.subr.bf16.mxu0 0
        %335 = vmatpush1.bf16.msra.mxu0 %v314
        %336 = vmatprep.subr.bf16.mxu0 0
        %337 = vmatpush1.bf16.msra.mxu0 %v315
        %338 = vmatprep.subr.bf16.mxu0 0
        %339 = vmatpush1.bf16.msra.mxu0 %v316
        %340 = vmatprep.subr.bf16.mxu0 0
        %341 = vmatpush1.bf16.msra.mxu0 %v317
        %342 = vmatprep.subr.bf16.mxu0 0
        %343 = vmatpush1.bf16.msra.mxu0 0
        %344 = vmatprep.subr.bf16.mxu0 0
        %345 = vmatpush1.bf16.msra.mxu0 0
        %346 = vmatprep.subr.bf16.mxu0 0
        %347 = vmatpush1.bf16.msra.mxu0 0
        %348 = vmatprep.subr.bf16.mxu0 0
        %349 = vmatpush1.bf16.msra.mxu0 0
        %350 = vmatprep.subr.bf16.mxu0 0
        %351 = vmatpush1.bf16.msra.mxu0 0
        %352 = vmatprep.subr.bf16.mxu0 0
        %353 = vmatpush1.bf16.msra.mxu0 0
        %354 = vmatprep.subr.bf16.mxu0 0
        %355 = vmatpush1.bf16.msra.mxu0 0
        %356 = vmatprep.subr.bf16.mxu0 0
        %357 = vmatpush1.bf16.msra.mxu0 0
        %358 = vmatprep.mubr.bf16.mxu0 0
        %359 = vmatmul.mubr.bf16.gmra.mrb[0].mxu0 %v254
        %v360 = vpop.f32.mrb[0].mxu0
        %v361 = vadd.f32 %v276, %v360
        %v362 = vpop.f32.mrb[0].mxu0
        %v363 = vpop.f32.mrb[0].mxu0
        %v364 = vpop.f32.mrb[0].mxu0
        %365 = vdwg.mxu0
        %366 = vst [vmem:[%s252] sm:$0xff] %v361
        %s367 = sand.u32 %s121, 1
        %s368 = scalar_lea.sflag [#allocation4], %s367
        %s369 = sand.u32 %s121, 1
        %s370 = smul.addr %s369, 8
        %s371 = scalar_lea.vmem [#allocation8], %s370
        // Predicated region
        $region45: #{arc_efficientnet_forward.3} parent=31 // pred_check
          %p372 = pneg %p131
        $region46: #{arc_efficientnet_forward.3} parent=31 // pred_check_branch
          %374 = sbr.rel (%p372) target = $region48
        $region47: #{arc_efficientnet_forward.3} parent=31 // pred_region
          %s376 = ssub.s32 128, 128
          %377 = vsyncadd %s368, %s376
          %s378 = smul.addr %s25, 2
          %s379 = sadd.s32 %s26, %s378
          %s380 = smul.addr %s379, 128
          %s381 = scalar_lea.hbm %s3, %s380
          %s383 = sshll.u32 %s371, 4
          %s384 = int_to_ptr.vmem [resolvable:$true] %s383
          %386 = dma.vmem_to_hbm [thread:$0]  %s384, 128, %s381, %s368
        $region48: #{arc_efficientnet_forward.3} parent=31 // pred_fallthru
          _
      $region32: #{arc_efficientnet_forward.3} parent=5 // pred_fallthru
        _
      %p387 = scmp.le.s32.totalorder 2, %s16
      // Predicated region
      $region49: #{arc_efficientnet_forward.3} parent=5 // pred_check
        %p388 = pneg %p387
      $region50: #{arc_efficientnet_forward.3} parent=5 // pred_check_branch
        %390 = sbr.rel (%p388) target = $region52
      $region51: #{arc_efficientnet_forward.3} parent=5 // pred_region
        %s391 = ssub.s32 %s16, 2
        // Predicated region
        $region53: #{arc_efficientnet_forward.3} parent=51 // pred_check
          %p392 = pneg %p137
        $region54: #{arc_efficientnet_forward.3} parent=51 // pred_check_branch
          %394 = sbr.rel (%p392) target = $region56
        $region55: #{arc_efficientnet_forward.3} parent=51 // pred_region
          %s395 = sand.u32 %s122, 1
          %s396 = scalar_lea.sflag [#allocation4], %s395
          %s397 = sand.u32 %s122, 1
          %s398 = smul.addr %s397, 8
          %s399 = scalar_lea.vmem [#allocation8], %s398
          %400 = dma.done %s396, 128
        $region56: #{arc_efficientnet_forward.3} parent=51 // pred_fallthru
          _
      $region52: #{arc_efficientnet_forward.3} parent=5 // pred_fallthru
        _
    $region6: #{arc_efficientnet_forward.3} parent=1 // loop_footer
      %s20 = sadd.s32 1, %s16
    $region7: #{arc_efficientnet_forward.3} parent=1 // loop_footer_branch
      %15 = sbr.rel target = $region3
    $region8: #{arc_efficientnet_forward.3} parent=1 // loop_exit
      _
    %401 = vsyncpa [#allocation3], 1
    %s402 = scalar_lea.sflag [#allocation3], 1
    %403 = vsyncpa %s402, 1
    %404 = vsyncpa [#allocation6], 1
    %s405 = scalar_lea.sflag [#allocation6], 1
    %406 = vsyncpa %s405, 1
    %407 = vsyncpa [#allocation4], 1
    %s408 = scalar_lea.sflag [#allocation4], 1
    %409 = vsyncpa %s408, 1

</llo_original>
